<compile_context>
chip_gen: v7x
topology: tpu7x:2x2x1
jax: 0.10.0
libtpu: 0.0.40
codegen_flags: <defaults>
</compile_context>

<pallas_src>
import functools

import jax
import jax.numpy as jnp
from jax import lax
from jax.experimental import pallas as pl
from jax.experimental.pallas import tpu as pltpu


def _supcon_kernel(*refs, temperature, base_temperature, block_m, block_n,
                   from_labels):
    """One (anchor-tile i, contrast-tile j) grid step.

    Anchors live on the lane axis of every accumulator and of the output, the
    contrast samples on the sublane axis of the score tile, so no transposes /
    relayouts are needed and the final store is lane-dense.

        s_t[jj, ii] = contrast[j*bn+jj] . anchor[i*bm+ii] / (temperature * 1000)

    Online accumulators (VMEM scratch, shape [1, block_m], anchors on lanes):
        m_run    running row max of s
        l_run    running sum exp(s - m_run) over off-diagonal contrasts
        ms_run   sum over positives of raw s   (the row max cancels analytically)
        msum_run number of positives
    """
    if from_labels:
        (a_feat_ref, c_feat_ref, a_lab_ref, c_lab_ref, loss_ref,
         m_run, l_run, ms_run, msum_run) = refs
    else:
        (a_feat_ref, c_feat_ref, mask_t_ref, loss_ref,
         m_run, l_run, ms_run, msum_run) = refs

    i = pl.program_id(0)        # anchor tile   ("parallel")
    j = pl.program_id(1)        # contrast tile ("arbitrary" -> reduction axis)

    @pl.when(j == 0)
    def _init():
        m_run[...] = jnp.full(m_run.shape, -jnp.inf, jnp.float32)
        l_run[...] = jnp.zeros(l_run.shape, jnp.float32)
        ms_run[...] = jnp.zeros(ms_run.shape, jnp.float32)
        msum_run[...] = jnp.zeros(msum_run.shape, jnp.float32)

    inv_scale = 1.0 / (temperature * 1000.0)
    a = a_feat_ref[...]          # [bm, D]  anchor features (constant across j)
    c = c_feat_ref[...]          # [bn, D]  contrast features (streamed)
    dims = (((1,), (1,)), ((), ()))   # contract both on last dim -> no transpose
    if a.dtype == jnp.float32:
        # Fold the scale into one matmul operand: bm*D muls instead of bm*bn.
        a = a * inv_scale
        s_t = lax.dot_general(c, a, dimension_numbers=dims,
                              preferred_element_type=jnp.float32)
    else:
        # Low-precision MXU input (e.g. bf16 on v6e/v7x): scale the f32 scores
        # instead, so the scale is not rounded into the narrow dtype.
        s_t = lax.dot_general(c, a, dimension_numbers=dims,
                              preferred_element_type=jnp.float32) * inv_scale
    # s_t : [bn, bm]

    # Build masks in-kernel (no dense [N, N] mask read from HBM).
    c_ids = j * block_n + lax.broadcasted_iota(jnp.int32, (block_n, block_m), 0)
    a_ids = i * block_m + lax.broadcasted_iota(jnp.int32, (block_n, block_m), 1)
    off_diag = c_ids != a_ids                                   # drop the diagonal
    if from_labels:
        same_class = c_lab_ref[...] == a_lab_ref[...]           # [bn,1]==[1,bm]
        pos = jnp.where(jnp.logical_and(same_class, off_diag), 1.0, 0.0)
    else:
        # [bn, bm] = mask.T tile; keep reference semantics (mask may be non-binary).
        pos = mask_t_ref[...] * jnp.where(off_diag, 1.0, 0.0)

    # Online logsumexp over off-diagonal contrasts (axis 0 = contrast).
    m_prev = m_run[...]
    m_new = jnp.maximum(m_prev, jnp.max(s_t, axis=0, keepdims=True))
    alpha = jnp.exp(m_prev - m_new)
    p = jnp.where(off_diag, jnp.exp(s_t - m_new), 0.0)
    l_run[...] = alpha * l_run[...] + jnp.sum(p, axis=0, keepdims=True)
    m_run[...] = m_new

    # sum(mask * log_prob) == sum(mask * s) - LSE * sum(mask): no log_prob temp.
    ms_run[...] = ms_run[...] + jnp.sum(pos * s_t, axis=0, keepdims=True)
    msum_run[...] = msum_run[...] + jnp.sum(pos, axis=0, keepdims=True)

    @pl.when(j == pl.num_programs(1) - 1)
    def _finalize():
        lse = m_run[...] + jnp.log(l_run[...])     # log sum_{k != i} exp(s_ik)
        # NOTE: anchors with zero positives give inf/nan, matching the reference.
        mean_log_prob_pos = (ms_run[...] * pl.reciprocal(msum_run[...], approx=True)
                             - lse)
        loss_ref[...] = (-(temperature / base_temperature)
                         * mean_log_prob_pos).astype(loss_ref.dtype)


def sup_con_loss(features, labels=None, mask=None, *, temperature=0.07,
                 contrast_mode="all", base_temperature=0.07,
                 block_size=128, matmul_dtype=jnp.float32):
    """JAX/Pallas equivalent of SupConLoss.forward (n_views == 1 case).

    block_size=128 matches the v5e 4x128^2 MXU; on v6e/v7x use block_size=256
    and matmul_dtype=jnp.bfloat16 for the 2x256^2 MXU (f32 accumulation kept).
    """
    features = jnp.asarray(features)
    if features.ndim < 3:
        raise ValueError("`features` needs to be [bsz, n_views, ...]")
    if features.ndim > 3:
        features = features.reshape(features.shape[0], features.shape[1], -1)
    bsz, n_views, dim = features.shape
    if contrast_mode not in ("one", "all"):
        raise ValueError(f"Unknown mode: {contrast_mode}")
    if n_views != 1:
        raise ValueError("Reference PyTorch code only supports n_views == 1")
    if labels is not None and mask is not None:
        raise ValueError("Cannot define both `labels` and `mask`")

    n = bsz
    feat = features[:, 0].astype(matmul_dtype)       # [N, D]
    anchor_count = 1                                  # n_views == 1: both modes identical

    bm = block_size if (n % block_size == 0) else n
    bn = bm
    grid = (n // bm, n // bn)

    common = dict(temperature=float(temperature),
                  base_temperature=float(base_temperature),
                  block_m=bm, block_n=bn)

    feat_specs = [
        pl.BlockSpec((bm, dim), lambda i, j: (i, 0)),   # anchor tile (same across j)
        pl.BlockSpec((bn, dim), lambda i, j: (j, 0)),   # contrast tile (streamed)
    ]

    if mask is None:
        # Labels fast path (also covers the default identity mask via arange).
        if labels is None:
            lab = jnp.arange(n, dtype=jnp.int32)
        else:
            lab = jnp.asarray(labels).reshape(-1).astype(jnp.int32)
            if lab.shape[0] != n:
                raise ValueError("Num of labels does not match num of features")
        kernel = functools.partial(_supcon_kernel, from_labels=True, **common)
        in_specs = feat_specs + [
            pl.BlockSpec((1, bm), lambda i, j: (0, i)),   # anchor labels (lanes)
            pl.BlockSpec((bn, 1), lambda i, j: (j, 0)),   # contrast labels (sublanes)
        ]
        args = (feat, feat, lab.reshape(1, n), lab.reshape(n, 1))
    else:
        # Explicit dense-mask fallback (streams N^2 floats; labels path preferred).
        mask_t = jnp.asarray(mask).astype(jnp.float32).T   # [contrast, anchor]
        kernel = functools.partial(_supcon_kernel, from_labels=False, **common)
        in_specs = feat_specs + [
            pl.BlockSpec((bn, bm), lambda i, j: (j, i)),
        ]
        args = (feat, feat, mask_t)

    per_anchor = pl.pallas_call(
        kernel,
        out_shape=jax.ShapeDtypeStruct((1, n), jnp.float32),   # lane-dense output
        grid_spec=pltpu.PrefetchScalarGridSpec(
            num_scalar_prefetch=0,
            grid=grid,
            in_specs=in_specs,
            out_specs=pl.BlockSpec((1, bm), lambda i, j: (0, i)),
            scratch_shapes=[pltpu.VMEM((1, bm), jnp.float32)] * 4,
        ),
        compiler_params=pltpu.CompilerParams(
            dimension_semantics=("parallel", "arbitrary")),
    )(*args)

    # loss.view(anchor_count, batch_size).mean()
    return per_anchor.reshape(anchor_count, n).mean()


def _sup_con_loss_ref(features, labels=None, mask=None, *, temperature=0.07,
                      base_temperature=0.07):
    """Pure-JAX reference mirroring the PyTorch code (n_views == 1) for validation."""
    bsz = features.shape[0]
    feat = features.reshape(bsz, features.shape[1], -1)[:, 0].astype(jnp.float32)
    if mask is None:
        labels = labels.reshape(-1, 1)
        mask = (labels == labels.T).astype(jnp.float32)
    else:
        mask = mask.astype(jnp.float32)
    sim = (feat @ feat.T) / (temperature * 1000.0)
    logits = sim - jnp.max(sim, axis=1, keepdims=True)
    logits_mask = 1.0 - jnp.eye(bsz, dtype=jnp.float32)
    mask = mask * logits_mask
    exp_logits = jnp.exp(logits) * logits_mask
    log_prob = logits - jnp.log(exp_logits.sum(1, keepdims=True))
    mean_log_prob_pos = (mask * log_prob).sum(1) / mask.sum(1)
    loss = -(temperature / base_temperature) * mean_log_prob_pos
    return loss.reshape(1, bsz).mean()


if __name__ == "__main__":
    key = jax.random.PRNGKey(0)
    bsz, n_views, dim = 256, 1, 128            # exercises a 2x2 grid of 128x128 tiles
    features = jax.random.normal(key, (bsz, n_views, dim), dtype=jnp.float32)
    # Deterministic labels, each class appearing 8 times (no zero-positive rows).
    labels = jnp.arange(bsz, dtype=jnp.int32) % 32

    ref = _sup_con_loss_ref(features, labels=labels)

    # Labels fast path (masks built in-kernel).
    loss = jax.block_until_ready(sup_con_loss(features, labels=labels))
    assert jnp.isfinite(loss), "loss is not finite"
    assert jnp.allclose(loss, ref, atol=1e-4, rtol=1e-4), (loss, ref)

    # Explicit dense-mask fallback path.
    dense_mask = (labels[:, None] == labels[None, :]).astype(jnp.float32)
    loss_m = jax.block_until_ready(sup_con_loss(features, mask=dense_mask))
    assert jnp.allclose(loss_m, ref, atol=1e-4, rtol=1e-4), (loss_m, ref)

    print("KERNEL_OK")
</pallas_src>

<mosaic_0001>
module attributes {stable_mosaic.version = 11 : i64} {
  func.func @_supcon_kernel(%arg0: i32, %arg1: i32, %arg2: memref<128x128xf32, #tpu.memory_space<vmem>>, %arg3: memref<128x128xf32, #tpu.memory_space<vmem>>, %arg4: memref<1x128xi32, #tpu.memory_space<vmem>>, %arg5: memref<128x1xi32, #tpu.memory_space<vmem>>, %arg6: memref<1x128xf32, #tpu.memory_space<vmem>>, %arg7: memref<1x128xf32, #tpu.memory_space<vmem>>, %arg8: memref<1x128xf32, #tpu.memory_space<vmem>>, %arg9: memref<1x128xf32, #tpu.memory_space<vmem>>, %arg10: memref<1x128xf32, #tpu.memory_space<vmem>>) attributes {dimension_semantics = [#tpu.dimension_semantics<parallel>, #tpu.dimension_semantics<arbitrary>], iteration_bounds = array<i64: 2, 2>, scalar_prefetch = 0 : i64, scratch_operands = 4 : i64, tpu.core_type = #tpu.core_type<tc>, window_params = [{transform_indices = @transform_0, window_bounds = array<i64: 128, 128>}, {transform_indices = @transform_1, window_bounds = array<i64: 128, 128>}, {transform_indices = @transform_2, window_bounds = array<i64: 1, 128>}, {transform_indices = @transform_3, window_bounds = array<i64: 128, 1>}, {transform_indices = @transform_4, window_bounds = array<i64: 1, 128>}]} {
    %c0_i32 = arith.constant 0 : i32
    %0 = arith.cmpi eq, %arg1, %c0_i32 : i32
    %1 = arith.extui %0 : i1 to i32
    %c0_i32_0 = arith.constant 0 : i32
    %2 = arith.cmpi ne, %1, %c0_i32_0 : i32
    scf.if %2 {
      %cst_34 = arith.constant 0xFF800000 : f32
      %58 = vector.broadcast %cst_34 : f32 to vector<1x128xf32>
      %c0_35 = arith.constant 0 : index
      %c0_36 = arith.constant 0 : index
      %59 = vector.load %arg7[%c0_35, %c0_36] : memref<1x128xf32, #tpu.memory_space<vmem>>, vector<1x128xf32>
      tpu.vector_store %arg7[%c0_35, %c0_36], %58 {strides = array<i32>} : memref<1x128xf32, #tpu.memory_space<vmem>>, vector<1x128xf32>,
      %cst_37 = arith.constant 0.000000e+00 : f32
      %60 = vector.broadcast %cst_37 : f32 to vector<1x128xf32>
      %c0_38 = arith.constant 0 : index
      %c0_39 = arith.constant 0 : index
      %61 = vector.load %arg8[%c0_38, %c0_39] : memref<1x128xf32, #tpu.memory_space<vmem>>, vector<1x128xf32>
      tpu.vector_store %arg8[%c0_38, %c0_39], %60 {strides = array<i32>} : memref<1x128xf32, #tpu.memory_space<vmem>>, vector<1x128xf32>,
      %cst_40 = arith.constant 0.000000e+00 : f32
      %62 = vector.broadcast %cst_40 : f32 to vector<1x128xf32>
      %c0_41 = arith.constant 0 : index
      %c0_42 = arith.constant 0 : index
      %63 = vector.load %arg9[%c0_41, %c0_42] : memref<1x128xf32, #tpu.memory_space<vmem>>, vector<1x128xf32>
      tpu.vector_store %arg9[%c0_41, %c0_42], %62 {strides = array<i32>} : memref<1x128xf32, #tpu.memory_space<vmem>>, vector<1x128xf32>,
      %cst_43 = arith.constant 0.000000e+00 : f32
      %64 = vector.broadcast %cst_43 : f32 to vector<1x128xf32>
      %c0_44 = arith.constant 0 : index
      %c0_45 = arith.constant 0 : index
      %65 = vector.load %arg10[%c0_44, %c0_45] : memref<1x128xf32, #tpu.memory_space<vmem>>, vector<1x128xf32>
      tpu.vector_store %arg10[%c0_44, %c0_45], %64 {strides = array<i32>} : memref<1x128xf32, #tpu.memory_space<vmem>>, vector<1x128xf32>,
    } else {
    }
    %c0 = arith.constant 0 : index
    %c0_1 = arith.constant 0 : index
    %3 = vector.load %arg2[%c0, %c0_1] : memref<128x128xf32, #tpu.memory_space<vmem>>, vector<128x128xf32>
    %c0_2 = arith.constant 0 : index
    %c0_3 = arith.constant 0 : index
    %4 = vector.load %arg3[%c0_2, %c0_3] : memref<128x128xf32, #tpu.memory_space<vmem>>, vector<128x128xf32>
    %cst = arith.constant 0.0142857144 : f32
    %5 = vector.broadcast %cst : f32 to vector<128x128xf32>
    %6 = arith.mulf %3, %5 : vector<128x128xf32>
    %cst_4 = arith.constant dense<0.000000e+00> : vector<128x128xf32>
    %7 = tpu.matmul %4, %6, %cst_4 {dimension_numbers = #tpu.dot_dimension_numbers<[1], [1], [0], [0], [0, 0, 1, 0], [], []>} : vector<128x128xf32>, vector<128x128xf32>, vector<128x128xf32> -> vector<128x128xf32>
    %c128_i32 = arith.constant 128 : i32
    %8 = arith.muli %arg1, %c128_i32 : i32
    %9 = tpu.iota {dimensions = array<i32: 0>} : vector<128x128xi32>
    %10 = vector.broadcast %8 : i32 to vector<128x128xi32>
    %11 = arith.addi %10, %9 : vector<128x128xi32>
    %c128_i32_5 = arith.constant 128 : i32
    %12 = arith.muli %arg0, %c128_i32_5 : i32
    %13 = tpu.iota {dimensions = array<i32: 1>} : vector<128x128xi32>
    %14 = vector.broadcast %12 : i32 to vector<128x128xi32>
    %15 = arith.addi %14, %13 : vector<128x128xi32>
    %16 = arith.cmpi ne, %11, %15 : vector<128x128xi32>
    %c0_6 = arith.constant 0 : index
    %c0_7 = arith.constant 0 : index
    %17 = vector.load %arg5[%c0_6, %c0_7] : memref<128x1xi32, #tpu.memory_space<vmem>>, vector<128x1xi32>
    %c0_8 = arith.constant 0 : index
    %c0_9 = arith.constant 0 : index
    %18 = vector.load %arg4[%c0_8, %c0_9] : memref<1x128xi32, #tpu.memory_space<vmem>>, vector<1x128xi32>
    %19 = vector.broadcast %17 : vector<128x1xi32> to vector<128x128xi32>
    %20 = vector.broadcast %18 : vector<1x128xi32> to vector<128x128xi32>
    %21 = arith.cmpi eq, %19, %20 : vector<128x128xi32>
    %22 = arith.andi %21, %16 : vector<128x128xi1>
    %cst_10 = arith.constant 1.000000e+00 : f32
    %cst_11 = arith.constant 0.000000e+00 : f32
    %23 = vector.broadcast %cst_10 : f32 to vector<128x128xf32>
    %24 = vector.broadcast %cst_11 : f32 to vector<128x128xf32>
    %25 = arith.select %22, %23, %24 : vector<128x128xi1>, vector<128x128xf32>
    %c0_12 = arith.constant 0 : index
    %c0_13 = arith.constant 0 : index
    %26 = vector.load %arg7[%c0_12, %c0_13] : memref<1x128xf32, #tpu.memory_space<vmem>>, vector<1x128xf32>
    %cst_14 = arith.constant dense<0xFF800000> : vector<128xf32>
    %27 = vector.multi_reduction <maximumf>, %7, %cst_14 [0] : vector<128x128xf32> to vector<128xf32>
    %28 = vector.shape_cast %27 : vector<128xf32> to vector<1x128xf32>
    %29 = arith.maximumf %26, %28 : vector<1x128xf32>
    %30 = arith.subf %26, %29 : vector<1x128xf32>
    %31 = math.exp %30 : vector<1x128xf32>
    %32 = vector.broadcast %29 : vector<1x128xf32> to vector<128x128xf32>
    %33 = arith.subf %7, %32 : vector<128x128xf32>
    %34 = math.exp %33 : vector<128x128xf32>
    %cst_15 = arith.constant 0.000000e+00 : f32
    %35 = vector.broadcast %cst_15 : f32 to vector<128x128xf32>
    %36 = arith.select %16, %34, %35 : vector<128x128xi1>, vector<128x128xf32>
    %c0_16 = arith.constant 0 : index
    %c0_17 = arith.constant 0 : index
    %37 = vector.load %arg8[%c0_16, %c0_17] : memref<1x128xf32, #tpu.memory_space<vmem>>, vector<1x128xf32>
    %38 = arith.mulf %31, %37 : vector<1x128xf32>
    %cst_18 = arith.constant dense<0.000000e+00> : vector<128xf32>
    %39 = vector.multi_reduction <add>, %36, %cst_18 [0] : vector<128x128xf32> to vector<128xf32>
    %40 = vector.shape_cast %39 : vector<128xf32> to vector<1x128xf32>
    %41 = arith.addf %38, %40 : vector<1x128xf32>
    %c0_19 = arith.constant 0 : index
    %c0_20 = arith.constant 0 : index
    %42 = vector.load %arg8[%c0_19, %c0_20] : memref<1x128xf32, #tpu.memory_space<vmem>>, vector<1x128xf32>
    tpu.vector_store %arg8[%c0_19, %c0_20], %41 {strides = array<i32>} : memref<1x128xf32, #tpu.memory_space<vmem>>, vector<1x128xf32>,
    %c0_21 = arith.constant 0 : index
    %c0_22 = arith.constant 0 : index
    %43 = vector.load %arg7[%c0_21, %c0_22] : memref<1x128xf32, #tpu.memory_space<vmem>>, vector<1x128xf32>
    tpu.vector_store %arg7[%c0_21, %c0_22], %29 {strides = array<i32>} : memref<1x128xf32, #tpu.memory_space<vmem>>, vector<1x128xf32>,
    %c0_23 = arith.constant 0 : index
    %c0_24 = arith.constant 0 : index
    %44 = vector.load %arg9[%c0_23, %c0_24] : memref<1x128xf32, #tpu.memory_space<vmem>>, vector<1x128xf32>
    %45 = arith.mulf %25, %7 : vector<128x128xf32>
    %cst_25 = arith.constant dense<0.000000e+00> : vector<128xf32>
    %46 = vector.multi_reduction <add>, %45, %cst_25 [0] : vector<128x128xf32> to vector<128xf32>
    %47 = vector.shape_cast %46 : vector<128xf32> to vector<1x128xf32>
    %48 = arith.addf %44, %47 : vector<1x128xf32>
    %c0_26 = arith.constant 0 : index
    %c0_27 = arith.constant 0 : index
    %49 = vector.load %arg9[%c0_26, %c0_27] : memref<1x128xf32, #tpu.memory_space<vmem>>, vector<1x128xf32>
    tpu.vector_store %arg9[%c0_26, %c0_27], %48 {strides = array<i32>} : memref<1x128xf32, #tpu.memory_space<vmem>>, vector<1x128xf32>,
    %c0_28 = arith.constant 0 : index
    %c0_29 = arith.constant 0 : index
    %50 = vector.load %arg10[%c0_28, %c0_29] : memref<1x128xf32, #tpu.memory_space<vmem>>, vector<1x128xf32>
    %cst_30 = arith.constant dense<0.000000e+00> : vector<128xf32>
    %51 = vector.multi_reduction <add>, %25, %cst_30 [0] : vector<128x128xf32> to vector<128xf32>
    %52 = vector.shape_cast %51 : vector<128xf32> to vector<1x128xf32>
    %53 = arith.addf %50, %52 : vector<1x128xf32>
    %c0_31 = arith.constant 0 : index
    %c0_32 = arith.constant 0 : index
    %54 = vector.load %arg10[%c0_31, %c0_32] : memref<1x128xf32, #tpu.memory_space<vmem>>, vector<1x128xf32>
    tpu.vector_store %arg10[%c0_31, %c0_32], %53 {strides = array<i32>} : memref<1x128xf32, #tpu.memory_space<vmem>>, vector<1x128xf32>,
    %c1_i32 = arith.constant 1 : i32
    %55 = arith.cmpi eq, %arg1, %c1_i32 : i32
    %56 = arith.extui %55 : i1 to i32
    %c0_i32_33 = arith.constant 0 : i32
    %57 = arith.cmpi ne, %56, %c0_i32_33 : i32
    scf.if %57 {
      %c0_34 = arith.constant 0 : index
      %c0_35 = arith.constant 0 : index
      %58 = vector.load %arg7[%c0_34, %c0_35] : memref<1x128xf32, #tpu.memory_space<vmem>>, vector<1x128xf32>
      %c0_36 = arith.constant 0 : index
      %c0_37 = arith.constant 0 : index
      %59 = vector.load %arg8[%c0_36, %c0_37] : memref<1x128xf32, #tpu.memory_space<vmem>>, vector<1x128xf32>
      %60 = math.log %59 : vector<1x128xf32>
      %61 = arith.addf %58, %60 : vector<1x128xf32>
      %c0_38 = arith.constant 0 : index
      %c0_39 = arith.constant 0 : index
      %62 = vector.load %arg9[%c0_38, %c0_39] : memref<1x128xf32, #tpu.memory_space<vmem>>, vector<1x128xf32>
      %c0_40 = arith.constant 0 : index
      %c0_41 = arith.constant 0 : index
      %63 = vector.load %arg10[%c0_40, %c0_41] : memref<1x128xf32, #tpu.memory_space<vmem>>, vector<1x128xf32>
      %64 = tpu.reciprocal %63 {approx = true} : vector<1x128xf32> -> vector<1x128xf32>
      %65 = arith.mulf %62, %64 : vector<1x128xf32>
      %66 = arith.subf %65, %61 : vector<1x128xf32>
      %cst_42 = arith.constant -1.000000e+00 : f32
      %67 = vector.broadcast %cst_42 : f32 to vector<1x128xf32>
      %68 = arith.mulf %67, %66 : vector<1x128xf32>
      %c0_43 = arith.constant 0 : index
      %c0_44 = arith.constant 0 : index
      %69 = vector.load %arg6[%c0_43, %c0_44] : memref<1x128xf32, #tpu.memory_space<vmem>>, vector<1x128xf32>
      tpu.vector_store %arg6[%c0_43, %c0_44], %68 {strides = array<i32>} : memref<1x128xf32, #tpu.memory_space<vmem>>, vector<1x128xf32>,
    } else {
    }
    return
  }
  func.func @transform_0(%arg0: i32, %arg1: i32) -> (i32, i32) {
    %c0_i32 = arith.constant 0 : i32
    %c0_i32_0 = arith.constant 0 : i32
    return %arg0, %c0_i32 : i32, i32
  }
  func.func @transform_1(%arg0: i32, %arg1: i32) -> (i32, i32) {
    %c0_i32 = arith.constant 0 : i32
    %c0_i32_0 = arith.constant 0 : i32
    return %arg1, %c0_i32 : i32, i32
  }
  func.func @transform_2(%arg0: i32, %arg1: i32) -> (i32, i32) {
    %c0_i32 = arith.constant 0 : i32
    %c0_i32_0 = arith.constant 0 : i32
    return %c0_i32, %arg0 : i32, i32
  }
  func.func @transform_3(%arg0: i32, %arg1: i32) -> (i32, i32) {
    %c0_i32 = arith.constant 0 : i32
    %c0_i32_0 = arith.constant 0 : i32
    return %arg1, %c0_i32 : i32, i32
  }
  func.func @transform_4(%arg0: i32, %arg1: i32) -> (i32, i32) {
    %c0_i32 = arith.constant 0 : i32
    %c0_i32_0 = arith.constant 0 : i32
    return %c0_i32, %arg0 : i32, i32
  }
}

</mosaic_0001>

<llo_original>
// kernel: tpu_custom_call.1
$region0: #{tpu_custom_call.1}
  #allocation0 [shape = 'u32[]', space=smem, size = 0x4, offset = 0x4, fixed_abs, tag = 'smem constant byte address 0x4 - core index']
  #allocation1 [shape = 'u32[144,128]{1,0:T(1,128)}', space=vmem, size = 0x12000, scoped, tag = 'internal scratch']
  #allocation2 [shape = 'f32[1,128]{1,0:T(1,128)}', space=vmem, size = 0x200, scoped, tag = 'scratch operand']
  #allocation3 [shape = 'f32[1,128]{1,0:T(1,128)}', space=vmem, size = 0x200, scoped, tag = 'scratch operand']
  #allocation4 [shape = 'f32[1,128]{1,0:T(1,128)}', space=vmem, size = 0x200, scoped, tag = 'scratch operand']
  #allocation5 [shape = 'f32[1,128]{1,0:T(1,128)}', space=vmem, size = 0x200, scoped, tag = 'scratch operand']
  %s0 = inlined_call_operand.vmem [shape: f32[256,128], index: 0, kind: input, shape index: {}]
  %s1 = inlined_call_operand.hbm [shape: f32[256,128], index: 1, kind: input, shape index: {}]
  %s2 = inlined_call_operand.vmem [shape: s32[1,256], index: 2, kind: input, shape index: {}]
  %s3 = inlined_call_operand.vmem [shape: s32[256,1], index: 3, kind: input, shape index: {}]
  %s4 = inlined_call_operand.hbm [shape: f32[1,256], index: 4, kind: output, shape index: {}]
  %s5 = sld [smem:[#allocation0]]
  $region61: #{tpu_custom_call.1} parent=0
    _
  %s7 = ssub.s32 1, %s5
  %s8 = scalar_select 0, %s7, %s5
  $region1: #{tpu_custom_call.1} parent=0
    #allocation6 [shape = 'u8[131072]{0}', space=vmem, size = 0x20000, scoped, tag = 'input window, operand 1']
    #allocation7 [shape = 's32[2]{0}', space=sflag, size = 0x8, scoped, tag = 'scoped memory for tpu_custom_call.1']
    #allocation8 [shape = 's32[2]{0}', space=sflag, size = 0x8, scoped, tag = 'scoped memory for tpu_custom_call.1']
    #allocation9 [shape = 'u8[1024]{0}', space=vmem, size = 0x400, scoped, tag = 'output window, operand 0']
    %9 = vsyncpa [#allocation7], 0
    %s10 = scalar_lea.sflag [#allocation7], 1
    %11 = vsyncpa %s10, 0
    %12 = vsyncpa [#allocation8], 0
    %s13 = scalar_lea.sflag [#allocation8], 1
    %14 = vsyncpa %s13, 0
    loop: start=0, step=1, limit=6
    $region2: #{tpu_custom_call.1} parent=1 // loop_pre_header
      _
    $region3: #{tpu_custom_call.1} parent=1 // loop_header
      %s16 = sphi 0, %s20
      %p17 = scmp.ge.s32.totalorder %s16, 6
      %s23 = sphi 0, %s35
      %s24 = sphi 0, %s31
      %s25 = sphi 0, %s23
      %s26 = sphi 0, %s24
      %s27 = sphi 0, %s25
      %s28 = sphi 0, %s26
      %s38 = sphi 0, %s40
      %s41 = sphi 0, %s38
      %s42 = sphi 0, %s41
      %s58 = sphi 0, %s42
      %s64 = sphi 0, %s66
      %s67 = sphi 0, %s64
      %s68 = sphi 0, %s67
      %s84 = sphi 0, %s68
      %s90 = sphi 0, %s92
      %s93 = sphi 0, %s90
      %s94 = sphi 0, %s93
      %s110 = sphi 0, %s94
      %s116 = sphi 0, %s118
      %s119 = sphi 0, %s116
      %s120 = sphi 0, %s119
      %s136 = sphi 0, %s120
      %s142 = sphi 0, %s144
      %s145 = sphi 0, %s142
      %s146 = sphi 0, %s145
      %s162 = sphi 0, %s146
    $region4: #{tpu_custom_call.1} parent=1 // loop_header_branch
      %19 = sbr.rel (%p17) target = $region8
    $region5: #{tpu_custom_call.1} parent=1 // loop_body
      %s21 = ssub.s32 %s16, 1
      %s22 = ssub.s32 %s16, 2
      %s29 = sadd.s32 1, %s24
      %p30 = scmp.ge.s32.totalorder %s29, 2
      %s31 = scalar_select %p30, 0, %s29
      %s32 = sadd.s32 1, %s23
      %s33 = scalar_select %p30, %s32, %s23
      %p34 = scmp.ge.s32.totalorder %s33, 2
      %s35 = scalar_select %p34, 0, %s33
      %s36 = ssub.s32 %s23, %s35
      %p37 = scmp.eq.s32.totalorder %s36, 0
      %s39 = sadd.s32 %s38, 1
      %s40 = scalar_select %p37, %s38, %s39
      %p43 = pneg %p37
      %p44 = scmp.eq.s32.totalorder %s16, 3
      %p45 = por %p43, %p44
      %p46 = scmp.ne.s32.totalorder %s38, %s41
      %p47 = scmp.eq.s32.totalorder %s16, 0
      %p48 = por %p46, %p47
      %p49 = scmp.ne.s32.totalorder %s38, %s41
      %p50 = scmp.eq.s32.totalorder %s21, 3
      %p51 = por %p49, %p50
      %p52 = scmp.ne.s32.totalorder %s41, %s42
      %p53 = scmp.eq.s32.totalorder %s21, 0
      %p54 = por %p52, %p53
      %p55 = scmp.ne.s32.totalorder %s41, %s42
      %p56 = scmp.eq.s32.totalorder %s22, 3
      %p57 = por %p55, %p56
      %p59 = scmp.ne.s32.totalorder %s42, %s58
      %p60 = scmp.eq.s32.totalorder %s22, 0
      %p61 = por %p59, %p60
      %s62 = ssub.s32 %s24, %s31
      %p63 = scmp.eq.s32.totalorder %s62, 0
      %s65 = sadd.s32 %s64, 1
      %s66 = scalar_select %p63, %s64, %s65
      %p69 = pneg %p63
      %p70 = scmp.eq.s32.totalorder %s16, 3
      %p71 = por %p69, %p70
      %p72 = scmp.ne.s32.totalorder %s64, %s67
      %p73 = scmp.eq.s32.totalorder %s16, 0
      %p74 = por %p72, %p73
      %p75 = scmp.ne.s32.totalorder %s64, %s67
      %p76 = scmp.eq.s32.totalorder %s21, 3
      %p77 = por %p75, %p76
      %p78 = scmp.ne.s32.totalorder %s67, %s68
      %p79 = scmp.eq.s32.totalorder %s21, 0
      %p80 = por %p78, %p79
      %p81 = scmp.ne.s32.totalorder %s67, %s68
      %p82 = scmp.eq.s32.totalorder %s22, 3
      %p83 = por %p81, %p82
      %p85 = scmp.ne.s32.totalorder %s68, %s84
      %p86 = scmp.eq.s32.totalorder %s22, 0
      %p87 = por %p85, %p86
      %s88 = ssub.s32 %s23, %s35
      %p89 = scmp.eq.s32.totalorder %s88, 0
      %s91 = sadd.s32 %s90, 1
      %s92 = scalar_select %p89, %s90, %s91
      %p95 = pneg %p89
      %p96 = scmp.eq.s32.totalorder %s16, 3
      %p97 = por %p95, %p96
      %p98 = scmp.ne.s32.totalorder %s90, %s93
      %p99 = scmp.eq.s32.totalorder %s16, 0
      %p100 = por %p98, %p99
      %p101 = scmp.ne.s32.totalorder %s90, %s93
      %p102 = scmp.eq.s32.totalorder %s21, 3
      %p103 = por %p101, %p102
      %p104 = scmp.ne.s32.totalorder %s93, %s94
      %p105 = scmp.eq.s32.totalorder %s21, 0
      %p106 = por %p104, %p105
      %p107 = scmp.ne.s32.totalorder %s93, %s94
      %p108 = scmp.eq.s32.totalorder %s22, 3
      %p109 = por %p107, %p108
      %p111 = scmp.ne.s32.totalorder %s94, %s110
      %p112 = scmp.eq.s32.totalorder %s22, 0
      %p113 = por %p111, %p112
      %s114 = ssub.s32 %s24, %s31
      %p115 = scmp.eq.s32.totalorder %s114, 0
      %s117 = sadd.s32 %s116, 1
      %s118 = scalar_select %p115, %s116, %s117
      %p121 = pneg %p115
      %p122 = scmp.eq.s32.totalorder %s16, 3
      %p123 = por %p121, %p122
      %p124 = scmp.ne.s32.totalorder %s116, %s119
      %p125 = scmp.eq.s32.totalorder %s16, 0
      %p126 = por %p124, %p125
      %p127 = scmp.ne.s32.totalorder %s116, %s119
      %p128 = scmp.eq.s32.totalorder %s21, 3
      %p129 = por %p127, %p128
      %p130 = scmp.ne.s32.totalorder %s119, %s120
      %p131 = scmp.eq.s32.totalorder %s21, 0
      %p132 = por %p130, %p131
      %p133 = scmp.ne.s32.totalorder %s119, %s120
      %p134 = scmp.eq.s32.totalorder %s22, 3
      %p135 = por %p133, %p134
      %p137 = scmp.ne.s32.totalorder %s120, %s136
      %p138 = scmp.eq.s32.totalorder %s22, 0
      %p139 = por %p137, %p138
      %s140 = ssub.s32 %s23, %s35
      %p141 = scmp.eq.s32.totalorder %s140, 0
      %s143 = sadd.s32 %s142, 1
      %s144 = scalar_select %p141, %s142, %s143
      %p147 = pneg %p141
      %p148 = scmp.eq.s32.totalorder %s16, 3
      %p149 = por %p147, %p148
      %p150 = scmp.ne.s32.totalorder %s142, %s145
      %p151 = scmp.eq.s32.totalorder %s16, 0
      %p152 = por %p150, %p151
      %p153 = scmp.ne.s32.totalorder %s142, %s145
      %p154 = scmp.eq.s32.totalorder %s21, 3
      %p155 = por %p153, %p154
      %p156 = scmp.ne.s32.totalorder %s145, %s146
      %p157 = scmp.eq.s32.totalorder %s21, 0
      %p158 = por %p156, %p157
      %p159 = scmp.ne.s32.totalorder %s145, %s146
      %p160 = scmp.eq.s32.totalorder %s22, 3
      %p161 = por %p159, %p160
      %p163 = scmp.ne.s32.totalorder %s146, %s162
      %p164 = scmp.eq.s32.totalorder %s22, 0
      %p165 = por %p163, %p164
      %p166 = scmp.le.s32.totalorder 1, %s16
      %p167 = scmp.lt.s32.totalorder %s16, 5
      %p168 = pnand %p166, %p167
      %p169 = pneg %p168
      // Predicated region
      $region9: #{tpu_custom_call.1} parent=5 // pred_check
        _
      $region10: #{tpu_custom_call.1} parent=5 // pred_check_branch
        %171 = sbr.rel (%p168) target = $region12
      $region11: #{tpu_custom_call.1} parent=5 // pred_region
        %s172 = ssub.s32 %s16, 1
      $region12: #{tpu_custom_call.1} parent=5 // pred_fallthru
        _
      %p173 = scmp.lt.s32.totalorder %s16, 4
      // Predicated region
      $region13: #{tpu_custom_call.1} parent=5 // pred_check
        %p174 = pneg %p173
      $region14: #{tpu_custom_call.1} parent=5 // pred_check_branch
        %176 = sbr.rel (%p174) target = $region16
      $region15: #{tpu_custom_call.1} parent=5 // pred_region
        // Predicated region
        $region17: #{tpu_custom_call.1} parent=15 // pred_check
          %p177 = pneg %p48
        $region18: #{tpu_custom_call.1} parent=15 // pred_check_branch
          %179 = sbr.rel (%p177) target = $region20
        $region19: #{tpu_custom_call.1} parent=15 // pred_region
          %s180 = smul.u32 16, %s23
          %p181 = scmp.lt.s32.totalorder %s180, 31
          %s182 = scalar_select %p181, %s180, 31
          %s183 = smul.addr %s182, 8
          %s184 = scalar_lea.vmem %s0, %s183
          %s185 = smul.u32 16, %s23
        $region20: #{tpu_custom_call.1} parent=15 // pred_fallthru
          _
        // Predicated region
        $region21: #{tpu_custom_call.1} parent=15 // pred_check
          %p186 = pneg %p74
        $region22: #{tpu_custom_call.1} parent=15 // pred_check_branch
          %188 = sbr.rel (%p186) target = $region24
        $region23: #{tpu_custom_call.1} parent=15 // pred_region
          %s189 = sand.u32 %s64, 1
          %s190 = scalar_lea.sflag [#allocation7], %s189
          %s191 = sand.u32 %s64, 1
          %s192 = smul.addr %s191, 128
          %s193 = scalar_lea.vmem [#allocation6], %s192
          %s194 = smul.u32 16, %s24
          %s196 = ssub.s32 2048, 2048
          %197 = vsyncadd %s190, %s196
          %s198 = smul.addr %s194, 128
          %s199 = scalar_lea.hbm %s1, %s198
          %s200 = sshll.u32 %s193, 4
          %s201 = int_to_ptr.vmem [resolvable:$true] %s200
          %206 = dma.hbm_to_vmem [thread:$0]  %s199, 2048, %s201, %s190, 128, 128, 8
        $region24: #{tpu_custom_call.1} parent=15 // pred_fallthru
          _
        // Predicated region
        $region25: #{tpu_custom_call.1} parent=15 // pred_check
          %p207 = pneg %p100
        $region26: #{tpu_custom_call.1} parent=15 // pred_check_branch
          %209 = sbr.rel (%p207) target = $region28
        $region27: #{tpu_custom_call.1} parent=15 // pred_region
          %p210 = scmp.lt.s32.totalorder %s23, 1
          %s211 = scalar_select %p210, %s23, 1
          %s212 = scalar_lea.vmem %s2, %s211
        $region28: #{tpu_custom_call.1} parent=15 // pred_fallthru
          _
        // Predicated region
        $region29: #{tpu_custom_call.1} parent=15 // pred_check
          %p213 = pneg %p126
        $region30: #{tpu_custom_call.1} parent=15 // pred_check_branch
          %215 = sbr.rel (%p213) target = $region32
        $region31: #{tpu_custom_call.1} parent=15 // pred_region
          %s216 = smul.u32 16, %s24
          %p217 = scmp.lt.s32.totalorder %s216, 31
          %s218 = scalar_select %p217, %s216, 31
          %s219 = smul.addr %s218, 8
          %s220 = scalar_lea.vmem %s3, %s219
          %s221 = smul.u32 16, %s24
        $region32: #{tpu_custom_call.1} parent=15 // pred_fallthru
          _
      $region16: #{tpu_custom_call.1} parent=5 // pred_fallthru
        _
      %p222 = scmp.le.s32.totalorder 1, %s16
      %p223 = scmp.lt.s32.totalorder %s16, 5
      %p224 = pnand %p222, %p223
      %p225 = pneg %p224
      // Predicated region
      $region33: #{tpu_custom_call.1} parent=5 // pred_check
        _
      $region34: #{tpu_custom_call.1} parent=5 // pred_check_branch
        %227 = sbr.rel (%p224) target = $region36
      $region35: #{tpu_custom_call.1} parent=5 // pred_region
        %s228 = ssub.s32 %s16, 1
        %s229 = sand.u32 %s67, 1
        %s230 = scalar_lea.sflag [#allocation7], %s229
        %s231 = sand.u32 %s67, 1
        %s232 = smul.addr %s231, 128
        %s233 = scalar_lea.vmem [#allocation6], %s232
        // Predicated region
        $region37: #{tpu_custom_call.1} parent=35 // pred_check
          %p234 = pneg %p80
        $region38: #{tpu_custom_call.1} parent=35 // pred_check_branch
          %236 = sbr.rel (%p234) target = $region40
        $region39: #{tpu_custom_call.1} parent=35 // pred_region
          %237 = dma.done %s230, 2048
        $region40: #{tpu_custom_call.1} parent=35 // pred_fallthru
          _
        %s238 = smul.u32 16, %s25
        %p239 = scmp.lt.s32.totalorder %s238, 31
        %s240 = scalar_select %p239, %s238, 31
        %s241 = smul.addr %s240, 8
        %s242 = scalar_lea.vmem %s0, %s241
        %p243 = pneg %p54
        %p244 = pneg %p51
        %s245 = sand.u32 %s67, 1
        %s246 = scalar_lea.sflag [#allocation7], %s245
        %s247 = sand.u32 %s67, 1
        %s248 = smul.addr %s247, 128
        %s249 = scalar_lea.vmem [#allocation6], %s248
        %p250 = pneg %p80
        %p251 = pneg %p77
        %p252 = scmp.lt.s32.totalorder %s25, 1
        %s253 = scalar_select %p252, %s25, 1
        %s254 = scalar_lea.vmem %s2, %s253
        %p255 = pneg %p106
        %p256 = pneg %p103
        %s257 = smul.u32 16, %s26
        %p258 = scmp.lt.s32.totalorder %s257, 31
        %s259 = scalar_select %p258, %s257, 31
        %s260 = smul.addr %s259, 8
        %s261 = scalar_lea.vmem %s3, %s260
        %p262 = pneg %p132
        %p263 = pneg %p129
        %p264 = pneg %p158
        %p265 = pneg %p155
        %s266 = sand.u32 %s145, 1
        %s267 = scalar_lea.sflag [#allocation8], %s266
        %s268 = sand.u32 %s145, 1
        %s269 = scalar_lea.vmem [#allocation9], %s268
        %s270 = smul.u32 16, %s25
        %p271 = scmp.lt.s32.totalorder %s270, 31
        %s272 = scalar_select %p271, %s270, 31
        %s273 = smul.addr %s272, 8
        %s274 = scalar_lea.vmem %s0, %s273
        %s275 = smul.u32 16, %s25
        %s276 = smul.u32 16, %s26
        %p277 = scmp.lt.s32.totalorder %s25, 1
        %s278 = scalar_select %p277, %s25, 1
        %s279 = scalar_lea.vmem %s2, %s278
        %s280 = smul.u32 16, %s26
        %p281 = scmp.lt.s32.totalorder %s280, 31
        %s282 = scalar_select %p281, %s280, 31
        %s283 = smul.addr %s282, 8
        %s284 = scalar_lea.vmem %s3, %s283
        %s285 = smul.u32 16, %s26
        %p286 = scmp.eq.s32.totalorder %s26, 0
        // Predicated region
        $region41: #{tpu_custom_call.1} parent=35 // pred_check
          %p287 = pneg %p286
        $region42: #{tpu_custom_call.1} parent=35 // pred_check_branch
          %289 = sbr.rel (%p287) target = $region44
        $region43: #{tpu_custom_call.1} parent=35 // pred_region
          %290 = vst [vmem:[#allocation2] sm:$0x1] -inf
          %291 = vst [vmem:[#allocation3] sm:$0x1] 0.0
          %292 = vst [vmem:[#allocation4] sm:$0x1] 0.0
          %293 = vst [vmem:[#allocation5] sm:$0x1] 0.0
        $region44: #{tpu_custom_call.1} parent=35 // pred_fallthru
          _
        %v294 = vld [vmem:[%s274] sm:$0xff]
        %v295 = vld [vmem:[%s274 + $0x8] sm:$0xff]
        %v296 = vld [vmem:[%s274 + $0x10] sm:$0xff]
        %v297 = vld [vmem:[%s274 + $0x18] sm:$0xff]
        %v298 = vld [vmem:[%s274 + $0x20] sm:$0xff]
        %v299 = vld [vmem:[%s274 + $0x28] sm:$0xff]
        %v300 = vld [vmem:[%s274 + $0x30] sm:$0xff]
        %v301 = vld [vmem:[%s274 + $0x38] sm:$0xff]
        %v302 = vld [vmem:[%s274 + $0x40] sm:$0xff]
        %v303 = vld [vmem:[%s274 + $0x48] sm:$0xff]
        %v304 = vld [vmem:[%s274 + $0x50] sm:$0xff]
        %v305 = vld [vmem:[%s274 + $0x58] sm:$0xff]
        %v306 = vld [vmem:[%s274 + $0x60] sm:$0xff]
        %v307 = vld [vmem:[%s274 + $0x68] sm:$0xff]
        %v308 = vld [vmem:[%s274 + $0x70] sm:$0xff]
        %v309 = vld [vmem:[%s274 + $0x78] sm:$0xff]
        %v310 = vld [vmem:[%s233] sm:$0xff]
        %v311 = vld [vmem:[%s233 + $0x8] sm:$0xff]
        %v312 = vld [vmem:[%s233 + $0x10] sm:$0xff]
        %v313 = vld [vmem:[%s233 + $0x18] sm:$0xff]
        %v314 = vld [vmem:[%s233 + $0x20] sm:$0xff]
        %v315 = vld [vmem:[%s233 + $0x28] sm:$0xff]
        %v316 = vld [vmem:[%s233 + $0x30] sm:$0xff]
        %v317 = vld [vmem:[%s233 + $0x38] sm:$0xff]
        %v318 = vld [vmem:[%s233 + $0x40] sm:$0xff]
        %v319 = vld [vmem:[%s233 + $0x48] sm:$0xff]
        %v320 = vld [vmem:[%s233 + $0x50] sm:$0xff]
        %v321 = vld [vmem:[%s233 + $0x58] sm:$0xff]
        %v322 = vld [vmem:[%s233 + $0x60] sm:$0xff]
        %v323 = vld [vmem:[%s233 + $0x68] sm:$0xff]
        %v324 = vld [vmem:[%s233 + $0x70] sm:$0xff]
        %v325 = vld [vmem:[%s233 + $0x78] sm:$0xff]
        %v326 = vmul.f32 %v294, 0.014285714
        %v327 = vmul.f32 %v295, 0.014285714
        %v328 = vmul.f32 %v296, 0.014285714
        %v329 = vmul.f32 %v297, 0.014285714
        %v330 = vmul.f32 %v298, 0.014285714
        %v331 = vmul.f32 %v299, 0.014285714
        %v332 = vmul.f32 %v300, 0.014285714
        %v333 = vmul.f32 %v301, 0.014285714
        %v334 = vmul.f32 %v302, 0.014285714
        %v335 = vmul.f32 %v303, 0.014285714
        %v336 = vmul.f32 %v304, 0.014285714
        %v337 = vmul.f32 %v305, 0.014285714
        %v338 = vmul.f32 %v306, 0.014285714
        %v339 = vmul.f32 %v307, 0.014285714
        %v340 = vmul.f32 %v308, 0.014285714
        %v341 = vmul.f32 %v309, 0.014285714
        %342 = vmatprep.subr.mxu0 0.0
        %343 = vmatpush1.xpose.msra.mxu0 %v326
        %344 = vmatprep.subr.mxu0 0.0
        %345 = vmatpush1.xpose.msra.mxu0 %v327
        %346 = vmatprep.subr.mxu0 0.0
        %347 = vmatpush1.xpose.msra.mxu0 %v328
        %348 = vmatprep.subr.mxu0 0.0
        %349 = vmatpush1.xpose.msra.mxu0 %v329
        %350 = vmatprep.subr.mxu0 0.0
        %351 = vmatpush1.xpose.msra.mxu0 %v330
        %352 = vmatprep.subr.mxu0 0.0
        %353 = vmatpush1.xpose.msra.mxu0 %v331
        %354 = vmatprep.subr.mxu0 0.0
        %355 = vmatpush1.xpose.msra.mxu0 %v332
        %356 = vmatprep.subr.mxu0 0.0
        %357 = vmatpush1.xpose.msra.mxu0 %v333
        %358 = vmatprep.subr.mxu0 0.0
        %359 = vmatpush1.xpose.msra.mxu0 %v334
        %360 = vmatprep.subr.mxu0 0.0
        %361 = vmatpush1.xpose.msra.mxu0 %v335
        %362 = vmatprep.subr.mxu0 0.0
        %363 = vmatpush1.xpose.msra.mxu0 %v336
        %364 = vmatprep.subr.mxu0 0.0
        %365 = vmatpush1.xpose.msra.mxu0 %v337
        %366 = vmatprep.subr.mxu0 0.0
        %367 = vmatpush1.xpose.msra.mxu0 %v338
        %368 = vmatprep.subr.mxu0 0.0
        %369 = vmatpush1.xpose.msra.mxu0 %v339
        %370 = vmatprep.subr.mxu0 0.0
        %371 = vmatpush1.xpose.msra.mxu0 %v340
        %372 = vmatprep.subr.mxu0 0.0
        %373 = vmatpush1.xpose.msra.mxu0 %v341
        %374 = vmatprep.subr.mxu0 0.0
        %375 = vmatpush1.xpose.msra.mxu0 0.0
        %376 = vmatprep.subr.mxu0 0.0
        %377 = vmatpush1.xpose.msra.mxu0 0.0
        %378 = vmatprep.subr.mxu0 0.0
        %379 = vmatpush1.xpose.msra.mxu0 0.0
        %380 = vmatprep.subr.mxu0 0.0
        %381 = vmatpush1.xpose.msra.mxu0 0.0
        %382 = vmatprep.subr.mxu0 0.0
        %383 = vmatpush1.xpose.msra.mxu0 0.0
        %384 = vmatprep.subr.mxu0 0.0
        %385 = vmatpush1.xpose.msra.mxu0 0.0
        %386 = vmatprep.subr.mxu0 0.0
        %387 = vmatpush1.xpose.msra.mxu0 0.0
        %388 = vmatprep.subr.mxu0 0.0
        %389 = vmatpush1.xpose.msra.mxu0 0.0
        %390 = vmatprep.subr.mxu0 0.0
        %391 = vmatpush1.xpose.msra.mxu0 0.0
        %392 = vmatprep.subr.mxu0 0.0
        %393 = vmatpush1.xpose.msra.mxu0 0.0
        %394 = vmatprep.subr.mxu0 0.0
        %395 = vmatpush1.xpose.msra.mxu0 0.0
        %396 = vmatprep.subr.mxu0 0.0
        %397 = vmatpush1.xpose.msra.mxu0 0.0
        %398 = vmatprep.subr.mxu0 0.0
        %399 = vmatpush1.xpose.msra.mxu0 0.0
        %400 = vmatprep.subr.mxu0 0.0
        %401 = vmatpush1.xpose.msra.mxu0 0.0
        %402 = vmatprep.subr.mxu0 0.0
        %403 = vmatpush1.xpose.msra.mxu0 0.0
        %404 = vmatprep.subr.mxu0 0.0
        %405 = vmatpush1.xpose.msra.mxu0 0.0
        %406 = vmatprep.mubr.f32.mxu0 0.0
        %407 = vmatmul.mubr.f32.gmra.mrb[0].mxu0 %v310
        %v408 = vpop.f32.mrb[0].mxu0
        %v409 = vadd.f32 0.0, %v408
        %v410 = vpop.f32.mrb[0].mxu0
        %411 = vmatprep.mubr.f32.mxu0 0.0
        %412 = vmatmul.mubr.f32.gmra.mrb[0].mxu0 %v311
        %v413 = vpop.f32.mrb[0].mxu0
        %v414 = vadd.f32 0.0, %v413
        %v415 = vpop.f32.mrb[0].mxu0
        %416 = vmatprep.mubr.f32.mxu0 0.0
        %417 = vmatmul.mubr.f32.gmra.mrb[0].mxu0 %v312
        %v418 = vpop.f32.mrb[0].mxu0
        %v419 = vadd.f32 0.0, %v418
        %v420 = vpop.f32.mrb[0].mxu0
        %421 = vmatprep.mubr.f32.mxu0 0.0
        %422 = vmatmul.mubr.f32.gmra.mrb[0].mxu0 %v313
        %v423 = vpop.f32.mrb[0].mxu0
        %v424 = vadd.f32 0.0, %v423
        %v425 = vpop.f32.mrb[0].mxu0
        %426 = vmatprep.mubr.f32.mxu0 0.0
        %427 = vmatmul.mubr.f32.gmra.mrb[0].mxu0 %v314
        %v428 = vpop.f32.mrb[0].mxu0
        %v429 = vadd.f32 0.0, %v428
        %v430 = vpop.f32.mrb[0].mxu0
        %431 = vmatprep.mubr.f32.mxu0 0.0
        %432 = vmatmul.mubr.f32.gmra.mrb[0].mxu0 %v315
        %v433 = vpop.f32.mrb[0].mxu0
        %v434 = vadd.f32 0.0, %v433
        %v435 = vpop.f32.mrb[0].mxu0
        %436 = vmatprep.mubr.f32.mxu0 0.0
        %437 = vmatmul.mubr.f32.gmra.mrb[0].mxu0 %v316
        %v438 = vpop.f32.mrb[0].mxu0
        %v439 = vadd.f32 0.0, %v438
        %v440 = vpop.f32.mrb[0].mxu0
        %441 = vmatprep.mubr.f32.mxu0 0.0
        %442 = vmatmul.mubr.f32.gmra.mrb[0].mxu0 %v317
        %v443 = vpop.f32.mrb[0].mxu0
        %v444 = vadd.f32 0.0, %v443
        %v445 = vpop.f32.mrb[0].mxu0
        %446 = vmatprep.mubr.f32.mxu0 0.0
        %447 = vmatmul.mubr.f32.gmra.mrb[0].mxu0 %v318
        %v448 = vpop.f32.mrb[0].mxu0
        %v449 = vadd.f32 0.0, %v448
        %v450 = vpop.f32.mrb[0].mxu0
        %451 = vmatprep.mubr.f32.mxu0 0.0
        %452 = vmatmul.mubr.f32.gmra.mrb[0].mxu0 %v319
        %v453 = vpop.f32.mrb[0].mxu0
        %v454 = vadd.f32 0.0, %v453
        %v455 = vpop.f32.mrb[0].mxu0
        %456 = vmatprep.mubr.f32.mxu0 0.0
        %457 = vmatmul.mubr.f32.gmra.mrb[0].mxu0 %v320
        %v458 = vpop.f32.mrb[0].mxu0
        %v459 = vadd.f32 0.0, %v458
        %v460 = vpop.f32.mrb[0].mxu0
        %461 = vmatprep.mubr.f32.mxu0 0.0
        %462 = vmatmul.mubr.f32.gmra.mrb[0].mxu0 %v321
        %v463 = vpop.f32.mrb[0].mxu0
        %v464 = vadd.f32 0.0, %v463
        %v465 = vpop.f32.mrb[0].mxu0
        %466 = vmatprep.mubr.f32.mxu0 0.0
        %467 = vmatmul.mubr.f32.gmra.mrb[0].mxu0 %v322
        %v468 = vpop.f32.mrb[0].mxu0
        %v469 = vadd.f32 0.0, %v468
        %v470 = vpop.f32.mrb[0].mxu0
        %471 = vmatprep.mubr.f32.mxu0 0.0
        %472 = vmatmul.mubr.f32.gmra.mrb[0].mxu0 %v323
        %v473 = vpop.f32.mrb[0].mxu0
        %v474 = vadd.f32 0.0, %v473
        %v475 = vpop.f32.mrb[0].mxu0
        %476 = vmatprep.mubr.f32.mxu0 0.0
        %477 = vmatmul.mubr.f32.gmra.mrb[0].mxu0 %v324
        %v478 = vpop.f32.mrb[0].mxu0
        %v479 = vadd.f32 0.0, %v478
        %v480 = vpop.f32.mrb[0].mxu0
        %481 = vmatprep.mubr.f32.mxu0 0.0
        %482 = vmatmul.mubr.f32.gmra.mrb[0].mxu0 %v325
        %v483 = vpop.f32.mrb[0].mxu0
        %v484 = vadd.f32 0.0, %v483
        %v485 = vpop.f32.mrb[0].mxu0
        %486 = vdwg.mxu0
        %s487 = smul.u32 %s26, 128
        %v488 = vlaneseq
        %v489 = vshrl.u32 %v488, 7
        %v490 = vadd.s32 %v489, 8
        %v491 = vadd.s32 %v489, 16
        %v492 = vadd.s32 %v489, 24
        %v493 = vadd.s32 %v489, 32
        %v494 = vadd.s32 %v489, 40
        %v495 = vadd.s32 %v489, 48
        %v496 = vadd.s32 %v489, 56
        %v497 = vadd.s32 %v489, 64
        %v498 = vadd.s32 %v489, 72
        %v499 = vadd.s32 %v489, 80
        %v500 = vadd.s32 %v489, 88
        %v501 = vadd.s32 %v489, 96
        %v502 = vadd.s32 %v489, 104
        %v503 = vadd.s32 %v489, 112
        %v504 = vadd.s32 %v489, 120
        %v505 = vstv %s487
        %v506 = vadd.s32 %v505, %v489
        %v507 = vadd.s32 %v505, %v490
        %v508 = vadd.s32 %v505, %v491
        %v509 = vadd.s32 %v505, %v492
        %v510 = vadd.s32 %v505, %v493
        %v511 = vadd.s32 %v505, %v494
        %v512 = vadd.s32 %v505, %v495
        %v513 = vadd.s32 %v505, %v496
        %v514 = vadd.s32 %v505, %v497
        %v515 = vadd.s32 %v505, %v498
        %v516 = vadd.s32 %v505, %v499
        %v517 = vadd.s32 %v505, %v500
        %v518 = vadd.s32 %v505, %v501
        %v519 = vadd.s32 %v505, %v502
        %v520 = vadd.s32 %v505, %v503
        %v521 = vadd.s32 %v505, %v504
        %s522 = smul.u32 %s25, 128
        %v523 = vlaneseq
        %v524 = vand.u32 %v523, 127
        %v525 = vstv %s522
        %v526 = vadd.s32 %v525, %v524
        %vm527 = vcmp.ne.s32.totalorder %v506, %v526
        %vm528 = vcmp.ne.s32.totalorder %v507, %v526
        %vm529 = vcmp.ne.s32.totalorder %v508, %v526
        %vm530 = vcmp.ne.s32.totalorder %v509, %v526
        %vm531 = vcmp.ne.s32.totalorder %v510, %v526
        %vm532 = vcmp.ne.s32.totalorder %v511, %v526
        %vm533 = vcmp.ne.s32.totalorder %v512, %v526
        %vm534 = vcmp.ne.s32.totalorder %v513, %v526
        %vm535 = vcmp.ne.s32.totalorder %v514, %v526
        %vm536 = vcmp.ne.s32.totalorder %v515, %v526
        %vm537 = vcmp.ne.s32.totalorder %v516, %v526
        %vm538 = vcmp.ne.s32.totalorder %v517, %v526
        %vm539 = vcmp.ne.s32.totalorder %v518, %v526
        %vm540 = vcmp.ne.s32.totalorder %v519, %v526
        %vm541 = vcmp.ne.s32.totalorder %v520, %v526
        %vm542 = vcmp.ne.s32.totalorder %v521, %v526
        %v543 = vld [vmem:[%s284] sm:$0xff]
        %v544 = vld [vmem:[%s284 + $0x8] sm:$0xff]
        %v545 = vld [vmem:[%s284 + $0x10] sm:$0xff]
        %v546 = vld [vmem:[%s284 + $0x18] sm:$0xff]
        %v547 = vld [vmem:[%s284 + $0x20] sm:$0xff]
        %v548 = vld [vmem:[%s284 + $0x28] sm:$0xff]
        %v549 = vld [vmem:[%s284 + $0x30] sm:$0xff]
        %v550 = vld [vmem:[%s284 + $0x38] sm:$0xff]
        %v551 = vld [vmem:[%s284 + $0x40] sm:$0xff]
        %v552 = vld [vmem:[%s284 + $0x48] sm:$0xff]
        %v553 = vld [vmem:[%s284 + $0x50] sm:$0xff]
        %v554 = vld [vmem:[%s284 + $0x58] sm:$0xff]
        %v555 = vld [vmem:[%s284 + $0x60] sm:$0xff]
        %v556 = vld [vmem:[%s284 + $0x68] sm:$0xff]
        %v557 = vld [vmem:[%s284 + $0x70] sm:$0xff]
        %v558 = vld [vmem:[%s284 + $0x78] sm:$0xff]
        %v559 = vld [vmem:[%s279] sm:$0x1]
        %560 = vset.pattern.permute.xlu0 0
        %561 = vperm.xlu0 %560, %v543
        %v562 = vpop.permute.xlu0 %561
        %563 = vset.pattern.permute.xlu0 0
        %564 = vperm.xlu0 %563, %v544
        %v565 = vpop.permute.xlu0 %564
        %566 = vset.pattern.permute.xlu0 0
        %567 = vperm.xlu0 %566, %v545
        %v568 = vpop.permute.xlu0 %567
        %569 = vset.pattern.permute.xlu0 0
        %570 = vperm.xlu0 %569, %v546
        %v571 = vpop.permute.xlu0 %570
        %572 = vset.pattern.permute.xlu0 0
        %573 = vperm.xlu0 %572, %v547
        %v574 = vpop.permute.xlu0 %573
        %575 = vset.pattern.permute.xlu0 0
        %576 = vperm.xlu0 %575, %v548
        %v577 = vpop.permute.xlu0 %576
        %578 = vset.pattern.permute.xlu0 0
        %579 = vperm.xlu0 %578, %v549
        %v580 = vpop.permute.xlu0 %579
        %581 = vset.pattern.permute.xlu0 0
        %582 = vperm.xlu0 %581, %v550
        %v583 = vpop.permute.xlu0 %582
        %584 = vset.pattern.permute.xlu0 0
        %585 = vperm.xlu0 %584, %v551
        %v586 = vpop.permute.xlu0 %585
        %587 = vset.pattern.permute.xlu0 0
        %588 = vperm.xlu0 %587, %v552
        %v589 = vpop.permute.xlu0 %588
        %590 = vset.pattern.permute.xlu0 0
        %591 = vperm.xlu0 %590, %v553
        %v592 = vpop.permute.xlu0 %591
        %593 = vset.pattern.permute.xlu0 0
        %594 = vperm.xlu0 %593, %v554
        %v595 = vpop.permute.xlu0 %594
        %596 = vset.pattern.permute.xlu0 0
        %597 = vperm.xlu0 %596, %v555
        %v598 = vpop.permute.xlu0 %597
        %599 = vset.pattern.permute.xlu0 0
        %600 = vperm.xlu0 %599, %v556
        %v601 = vpop.permute.xlu0 %600
        %602 = vset.pattern.permute.xlu0 0
        %603 = vperm.xlu0 %602, %v557
        %v604 = vpop.permute.xlu0 %603
        %605 = vset.pattern.permute.xlu0 0
        %606 = vperm.xlu0 %605, %v558
        %v607 = vpop.permute.xlu0 %606
        %v608 = vlaneseq
        %v609 = vshrl.u32 %v608, 7
        %v610 = vsub.s32 0, %v609
        %v611 = vrot.slane %v559, %v610
        %vm612 = vcmp.eq.s32.totalorder %v562, %v611
        %vm613 = vcmp.eq.s32.totalorder %v565, %v611
        %vm614 = vcmp.eq.s32.totalorder %v568, %v611
        %vm615 = vcmp.eq.s32.totalorder %v571, %v611
        %vm616 = vcmp.eq.s32.totalorder %v574, %v611
        %vm617 = vcmp.eq.s32.totalorder %v577, %v611
        %vm618 = vcmp.eq.s32.totalorder %v580, %v611
        %vm619 = vcmp.eq.s32.totalorder %v583, %v611
        %vm620 = vcmp.eq.s32.totalorder %v586, %v611
        %vm621 = vcmp.eq.s32.totalorder %v589, %v611
        %vm622 = vcmp.eq.s32.totalorder %v592, %v611
        %vm623 = vcmp.eq.s32.totalorder %v595, %v611
        %vm624 = vcmp.eq.s32.totalorder %v598, %v611
        %vm625 = vcmp.eq.s32.totalorder %v601, %v611
        %vm626 = vcmp.eq.s32.totalorder %v604, %v611
        %vm627 = vcmp.eq.s32.totalorder %v607, %v611
        %vm628 = vmand %vm612, %vm527
        %vm629 = vmand %vm613, %vm528
        %vm630 = vmand %vm614, %vm529
        %vm631 = vmand %vm615, %vm530
        %vm632 = vmand %vm616, %vm531
        %vm633 = vmand %vm617, %vm532
        %vm634 = vmand %vm618, %vm533
        %vm635 = vmand %vm619, %vm534
        %vm636 = vmand %vm620, %vm535
        %vm637 = vmand %vm621, %vm536
        %vm638 = vmand %vm622, %vm537
        %vm639 = vmand %vm623, %vm538
        %vm640 = vmand %vm624, %vm539
        %vm641 = vmand %vm625, %vm540
        %vm642 = vmand %vm626, %vm541
        %vm643 = vmand %vm627, %vm542
        %v644 = vsel %vm628, 1.0, 0.0
        %v645 = vsel %vm629, 1.0, 0.0
        %v646 = vsel %vm630, 1.0, 0.0
        %v647 = vsel %vm631, 1.0, 0.0
        %v648 = vsel %vm632, 1.0, 0.0
        %v649 = vsel %vm633, 1.0, 0.0
        %v650 = vsel %vm634, 1.0, 0.0
        %v651 = vsel %vm635, 1.0, 0.0
        %v652 = vsel %vm636, 1.0, 0.0
        %v653 = vsel %vm637, 1.0, 0.0
        %v654 = vsel %vm638, 1.0, 0.0
        %v655 = vsel %vm639, 1.0, 0.0
        %v656 = vsel %vm640, 1.0, 0.0
        %v657 = vsel %vm641, 1.0, 0.0
        %v658 = vsel %vm642, 1.0, 0.0
        %v659 = vsel %vm643, 1.0, 0.0
        %v660 = vld [vmem:[#allocation2] sm:$0x1]
        %v661 = vmax.f32 %v409, %v429
        %v662 = vmax.f32 %v414, %v434
        %v663 = vmax.f32 %v419, %v439
        %v664 = vmax.f32 %v424, %v444
        %v665 = vmax.f32 %v661, %v449
        %v666 = vmax.f32 %v662, %v454
        %v667 = vmax.f32 %v663, %v459
        %v668 = vmax.f32 %v664, %v464
        %v669 = vmax.f32 %v665, %v469
        %v670 = vmax.f32 %v666, %v474
        %v671 = vmax.f32 %v667, %v479
        %v672 = vmax.f32 %v668, %v484
        %v673 = vmax.f32 %v669, %v670
        %v674 = vmax.f32 %v671, %v672
        %v675 = vmax.f32 %v673, %v674
        %v676 = vrot.slane %v675, 4
        %v677 = vmax.f32 %v675, %v676
        %v678 = vrot.slane %v677, 2
        %v679 = vmax.f32 %v677, %v678
        %v680 = vrot.slane %v679, 1
        %v681 = vmax.f32 %v679, %v680
        %v682 = vmax.f32 %v660, %v681
        %v683 = vsub.f32 %v660, %v682
        %v684 = vmul.f32 %v683, 1.442695
        %v685 = vpow.pop %v684
        %v687 = vlaneseq
        %v688 = vshrl.u32 %v687, 7
        %v689 = vsub.s32 0, %v688
        %v690 = vrot.slane %v682, %v689
        %v692 = vsub.f32 %v409, %v690
        %v693 = vsub.f32 %v414, %v690
        %v694 = vsub.f32 %v419, %v690
        %v695 = vsub.f32 %v424, %v690
        %v696 = vsub.f32 %v429, %v690
        %v697 = vsub.f32 %v434, %v690
        %v698 = vsub.f32 %v439, %v690
        %v699 = vsub.f32 %v444, %v690
        %v700 = vsub.f32 %v449, %v690
        %v701 = vsub.f32 %v454, %v690
        %v702 = vsub.f32 %v459, %v690
        %v703 = vsub.f32 %v464, %v690
        %v704 = vsub.f32 %v469, %v690
        %v705 = vsub.f32 %v474, %v690
        %v706 = vsub.f32 %v479, %v690
        %v707 = vsub.f32 %v484, %v690
        %v708 = vmul.f32 %v692, 1.442695
        %v709 = vpow.pop %v708
        %v710 = vmul.f32 %v693, 1.442695
        %v711 = vpow.pop %v710
        %v712 = vmul.f32 %v694, 1.442695
        %v713 = vpow.pop %v712
        %v714 = vmul.f32 %v695, 1.442695
        %v715 = vpow.pop %v714
        %v716 = vmul.f32 %v696, 1.442695
        %v717 = vpow.pop %v716
        %v718 = vmul.f32 %v697, 1.442695
        %v719 = vpow.pop %v718
        %v720 = vmul.f32 %v698, 1.442695
        %v721 = vpow.pop %v720
        %v722 = vmul.f32 %v699, 1.442695
        %v723 = vpow.pop %v722
        %v724 = vmul.f32 %v700, 1.442695
        %v725 = vpow.pop %v724
        %v726 = vmul.f32 %v701, 1.442695
        %v727 = vpow.pop %v726
        %v728 = vmul.f32 %v702, 1.442695
        %v729 = vpow.pop %v728
        %v730 = vmul.f32 %v703, 1.442695
        %v731 = vpow.pop %v730
        %v732 = vmul.f32 %v704, 1.442695
        %v733 = vpow.pop %v732
        %v734 = vmul.f32 %v705, 1.442695
        %v735 = vpow.pop %v734
        %v736 = vmul.f32 %v706, 1.442695
        %v737 = vpow.pop %v736
        %v738 = vmul.f32 %v707, 1.442695
        %v739 = vpow.pop %v738
        %v740 = vsel %vm527, %v709, 0.0
        %v741 = vsel %vm528, %v711, 0.0
        %v742 = vsel %vm529, %v713, 0.0
        %v743 = vsel %vm530, %v715, 0.0
        %v744 = vsel %vm531, %v717, 0.0
        %v745 = vsel %vm532, %v719, 0.0
        %v746 = vsel %vm533, %v721, 0.0
        %v747 = vsel %vm534, %v723, 0.0
        %v748 = vsel %vm535, %v725, 0.0
        %v749 = vsel %vm536, %v727, 0.0
        %v750 = vsel %vm537, %v729, 0.0
        %v751 = vsel %vm538, %v731, 0.0
        %v752 = vsel %vm539, %v733, 0.0
        %v753 = vsel %vm540, %v735, 0.0
        %v754 = vsel %vm541, %v737, 0.0
        %v755 = vsel %vm542, %v739, 0.0
        %v756 = vld [vmem:[#allocation3] sm:$0x1]
        %v757 = vmul.f32 %v685, %v756
        %v758 = vadd.f32 %v740, %v741
        %v759 = vadd.f32 %v758, %v742
        %v760 = vadd.f32 %v759, %v743
        %v761 = vadd.f32 %v760, %v744
        %v762 = vadd.f32 %v761, %v745
        %v763 = vadd.f32 %v762, %v746
        %v764 = vadd.f32 %v763, %v747
        %v765 = vadd.f32 %v764, %v748
        %v766 = vadd.f32 %v765, %v749
        %v767 = vadd.f32 %v766, %v750
        %v768 = vadd.f32 %v767, %v751
        %v769 = vadd.f32 %v768, %v752
        %v770 = vadd.f32 %v769, %v753
        %v771 = vadd.f32 %v770, %v754
        %v772 = vadd.f32 %v771, %v755
        %v773 = vrot.slane %v772, 4
        %v774 = vadd.f32 %v772, %v773
        %v775 = vrot.slane %v774, 2
        %v776 = vadd.f32 %v774, %v775
        %v777 = vrot.slane %v776, 1
        %v778 = vadd.f32 %v776, %v777
        %v779 = vadd.f32 %v757, %v778
        %780 = vst [vmem:[#allocation3] sm:$0x1] %v779
        %781 = vst [vmem:[#allocation2] sm:$0x1] %v682
        %v782 = vld [vmem:[#allocation4] sm:$0x1]
        %v783 = vmul.f32 %v644, %v409
        %v784 = vmul.f32 %v645, %v414
        %v785 = vmul.f32 %v646, %v419
        %v786 = vmul.f32 %v647, %v424
        %v787 = vmul.f32 %v648, %v429
        %v788 = vmul.f32 %v649, %v434
        %v789 = vmul.f32 %v650, %v439
        %v790 = vmul.f32 %v651, %v444
        %v791 = vmul.f32 %v652, %v449
        %v792 = vmul.f32 %v653, %v454
        %v793 = vmul.f32 %v654, %v459
        %v794 = vmul.f32 %v655, %v464
        %v795 = vmul.f32 %v656, %v469
        %v796 = vmul.f32 %v657, %v474
        %v797 = vmul.f32 %v658, %v479
        %v798 = vmul.f32 %v659, %v484
        %v799 = vadd.f32 %v783, %v784
        %v800 = vadd.f32 %v799, %v785
        %v801 = vadd.f32 %v800, %v786
        %v802 = vadd.f32 %v801, %v787
        %v803 = vadd.f32 %v802, %v788
        %v804 = vadd.f32 %v803, %v789
        %v805 = vadd.f32 %v804, %v790
        %v806 = vadd.f32 %v805, %v791
        %v807 = vadd.f32 %v806, %v792
        %v808 = vadd.f32 %v807, %v793
        %v809 = vadd.f32 %v808, %v794
        %v810 = vadd.f32 %v809, %v795
        %v811 = vadd.f32 %v810, %v796
        %v812 = vadd.f32 %v811, %v797
        %v813 = vadd.f32 %v812, %v798
        %v814 = vrot.slane %v813, 4
        %v815 = vadd.f32 %v813, %v814
        %v816 = vrot.slane %v815, 2
        %v817 = vadd.f32 %v815, %v816
        %v818 = vrot.slane %v817, 1
        %v819 = vadd.f32 %v817, %v818
        %v820 = vadd.f32 %v782, %v819
        %821 = vst [vmem:[#allocation4] sm:$0x1] %v820
        %v822 = vld [vmem:[#allocation5] sm:$0x1]
        %v823 = vadd.f32 %v644, %v645
        %v824 = vadd.f32 %v823, %v646
        %v825 = vadd.f32 %v824, %v647
        %v826 = vadd.f32 %v825, %v648
        %v827 = vadd.f32 %v826, %v649
        %v828 = vadd.f32 %v827, %v650
        %v829 = vadd.f32 %v828, %v651
        %v830 = vadd.f32 %v829, %v652
        %v831 = vadd.f32 %v830, %v653
        %v832 = vadd.f32 %v831, %v654
        %v833 = vadd.f32 %v832, %v655
        %v834 = vadd.f32 %v833, %v656
        %v835 = vadd.f32 %v834, %v657
        %v836 = vadd.f32 %v835, %v658
        %v837 = vadd.f32 %v836, %v659
        %v838 = vrot.slane %v837, 4
        %v839 = vadd.f32 %v837, %v838
        %v840 = vrot.slane %v839, 2
        %v841 = vadd.f32 %v839, %v840
        %v842 = vrot.slane %v841, 1
        %v843 = vadd.f32 %v841, %v842
        %v844 = vadd.f32 %v822, %v843
        %845 = vst [vmem:[#allocation5] sm:$0x1] %v844
        %p846 = scmp.eq.s32.totalorder %s26, 1
        // Predicated region
        $region45: #{tpu_custom_call.1} parent=35 // pred_check
          %p847 = pneg %p846
        $region46: #{tpu_custom_call.1} parent=35 // pred_check_branch
          %849 = sbr.rel (%p847) target = $region48
        $region47: #{tpu_custom_call.1} parent=35 // pred_region
          %v850 = vld [vmem:[#allocation2] sm:$0x1]
          %v851 = vld [vmem:[#allocation3] sm:$0x1]
          %v852 = vlog2.pop %v851
          %v853 = vmul.f32 %v852, 0.6931472
          %v854 = vadd.f32 %v850, %v853
          %v855 = vld [vmem:[#allocation4] sm:$0x1]
          %v856 = vld [vmem:[#allocation5] sm:$0x1]
          %v857 = vrcp.pop %v856
          %v858 = vmul.f32 %v855, %v857
          %v859 = vsub.f32 %v858, %v854
          %v860 = vmul.f32 %v859, -1.0
          %861 = vst [vmem:[%s269] sm:$0x1] %v860
        $region48: #{tpu_custom_call.1} parent=35 // pred_fallthru
          _
        %s862 = sand.u32 %s145, 1
        %s863 = scalar_lea.sflag [#allocation8], %s862
        %s864 = sand.u32 %s145, 1
        %s865 = scalar_lea.vmem [#allocation9], %s864
        // Predicated region
        $region49: #{tpu_custom_call.1} parent=35 // pred_check
          %p866 = pneg %p155
        $region50: #{tpu_custom_call.1} parent=35 // pred_check_branch
          %868 = sbr.rel (%p866) target = $region52
        $region51: #{tpu_custom_call.1} parent=35 // pred_region
          %s870 = ssub.s32 16, 16
          %871 = vsyncadd %s863, %s870
          %s872 = smul.addr %s25, 16
          %s873 = scalar_lea.hbm %s4, %s872
          %s875 = sshll.u32 %s865, 4
          %s876 = int_to_ptr.vmem [resolvable:$true] %s875
          %878 = dma.vmem_to_hbm [thread:$0]  %s876, 16, %s873, %s863
        $region52: #{tpu_custom_call.1} parent=35 // pred_fallthru
          _
      $region36: #{tpu_custom_call.1} parent=5 // pred_fallthru
        _
      %p879 = scmp.le.s32.totalorder 2, %s16
      // Predicated region
      $region53: #{tpu_custom_call.1} parent=5 // pred_check
        %p880 = pneg %p879
      $region54: #{tpu_custom_call.1} parent=5 // pred_check_branch
        %882 = sbr.rel (%p880) target = $region56
      $region55: #{tpu_custom_call.1} parent=5 // pred_region
        %s883 = ssub.s32 %s16, 2
        // Predicated region
        $region57: #{tpu_custom_call.1} parent=55 // pred_check
          %p884 = pneg %p161
        $region58: #{tpu_custom_call.1} parent=55 // pred_check_branch
          %886 = sbr.rel (%p884) target = $region60
        $region59: #{tpu_custom_call.1} parent=55 // pred_region
          %s887 = sand.u32 %s146, 1
          %s888 = scalar_lea.sflag [#allocation8], %s887
          %s889 = sand.u32 %s146, 1
          %s890 = scalar_lea.vmem [#allocation9], %s889
          %891 = dma.done %s888, 16
        $region60: #{tpu_custom_call.1} parent=55 // pred_fallthru
          _
      $region56: #{tpu_custom_call.1} parent=5 // pred_fallthru
        _
    $region6: #{tpu_custom_call.1} parent=1 // loop_footer
      %s20 = sadd.s32 1, %s16
    $region7: #{tpu_custom_call.1} parent=1 // loop_footer_branch
      %15 = sbr.rel target = $region3
    $region8: #{tpu_custom_call.1} parent=1 // loop_exit
      _
    %892 = vsyncpa [#allocation7], 1
    %s893 = scalar_lea.sflag [#allocation7], 1
    %894 = vsyncpa %s893, 1
    %895 = vsyncpa [#allocation8], 1
    %s896 = scalar_lea.sflag [#allocation8], 1
    %897 = vsyncpa %s896, 1

</llo_original>
